<compile_context>
chip_gen: v6e
topology: v6e:2x2x1
jax: 0.10.0
libtpu: 0.0.40
codegen_flags: <defaults>
</compile_context>

<pallas_src>
import jax
import jax.numpy as jnp
from jax import lax
from jax.experimental import pallas as pl
from jax.experimental.pallas import tpu as pltpu


def _rup(n, m):
    return ((n + m - 1) // m) * m


def pack_params(w1, b1, w2, b2, w3, b3):
    """Pack all weights/biases into one lane-dense (R, C) f32 slab (single DMA).

    Column layout (lane axis):   W1 at [0:H) | W2 at [c_w2:c_w2+Dout) | W3 ...
    Row layout  (sublane axis):  weights start at row 0; biases occupy three
    dedicated rows (each starting at lane 0) below the tallest weight block.
    All offsets are multiples of 8; C is rounded up to a multiple of 128 so the
    slab DMA uses full 512 B lines.
    """
    din, h = w1.shape
    h2, dout = w2.shape
    assert h2 == h and w3.shape == (dout, dout)
    assert b1.reshape(-1).shape[0] == h
    assert b2.reshape(-1).shape[0] == dout and b3.reshape(-1).shape[0] == dout

    c_w1 = 0
    c_w2 = _rup(h, 8)
    c_w3 = c_w2 + _rup(dout, 8)
    cols = _rup(c_w3 + dout, 128)

    r_b = _rup(max(din, h, dout), 8)
    r_b1, r_b2, r_b3 = r_b, r_b + 1, r_b + 2
    rows = _rup(r_b3 + 1, 8)

    # Region non-overlap sanity checks (review correctness concern).
    assert c_w2 >= c_w1 + h and c_w3 >= c_w2 + dout and cols >= c_w3 + dout
    assert r_b >= max(din, h, dout) and rows >= r_b3 + 1

    p = jnp.zeros((rows, cols), jnp.float32)
    p = p.at[:din, c_w1:c_w1 + h].set(w1.astype(jnp.float32))
    p = p.at[:h, c_w2:c_w2 + dout].set(w2.astype(jnp.float32))
    p = p.at[:dout, c_w3:c_w3 + dout].set(w3.astype(jnp.float32))
    p = p.at[r_b1, :h].set(b1.reshape(-1).astype(jnp.float32))
    p = p.at[r_b2, :dout].set(b2.reshape(-1).astype(jnp.float32))
    p = p.at[r_b3, :dout].set(b3.reshape(-1).astype(jnp.float32))

    offsets = dict(c_w1=c_w1, c_w2=c_w2, c_w3=c_w3,
                   r_b1=r_b1, r_b2=r_b2, r_b3=r_b3)
    return p, offsets, (din, h, dout)


def _make_kernel(offsets, dims, tile_b):
    din, h, dout = dims
    c_w1, c_w2, c_w3 = offsets["c_w1"], offsets["c_w2"], offsets["c_w3"]
    r_b1, r_b2, r_b3 = offsets["r_b1"], offsets["r_b2"], offsets["r_b3"]

    def kernel(x_ref, p_ref, o_ref):
        xb = x_ref[...]                                           # (TILE_B, Din)

        # F.normalize per row: x / max(||x||_2, 1e-12) == x * rsqrt(max(ss,1e-24))
        ss = jnp.sum(xb * xb, axis=1, keepdims=True)              # (TILE_B, 1)
        xn = xb * lax.rsqrt(jnp.maximum(ss, 1e-24))

        # proj1 + relu  (MXU)
        w1 = p_ref[0:din, c_w1:c_w1 + h]                          # (Din, H)
        b1 = p_ref[r_b1:r_b1 + 1, 0:h]                            # (1, H)
        h1 = jnp.dot(xn, w1, preferred_element_type=jnp.float32) + b1
        h1 = jnp.maximum(h1, 0.0)                                 # (TILE_B, H)

        # proj2 + relu  (MXU)
        w2 = p_ref[0:h, c_w2:c_w2 + dout]                         # (H, Dout)
        b2 = p_ref[r_b2:r_b2 + 1, 0:dout]                         # (1, Dout)
        h2 = jnp.dot(h1, w2, preferred_element_type=jnp.float32) + b2
        h2 = jnp.maximum(h2, 0.0)                                 # (TILE_B, Dout)

        # proj3  (MXU)
        w3 = p_ref[0:dout, c_w3:c_w3 + dout]                      # (Dout, Dout)
        b3 = p_ref[r_b3:r_b3 + 1, 0:dout]                         # (1, Dout)
        o3 = jnp.dot(h2, w3, preferred_element_type=jnp.float32) + b3

        # Merged head: softmax over the first Dout-1 lanes, sigmoid on the
        # last lane, written as one (TILE_B, Dout) block.  With dout=8 the
        # store uses 8/128 lanes -- acceptable at these sizes.
        lane = lax.broadcasted_iota(jnp.int32, (tile_b, dout), 1)
        is_last = lane == (dout - 1)

        masked = jnp.where(is_last, -jnp.inf, o3)
        m = jnp.max(masked, axis=-1, keepdims=True)
        e = jnp.exp(masked - m)                                    # 0 at last lane
        denom = jnp.sum(e, axis=-1, keepdims=True)
        sm = e / denom                                             # exact division

        sg = 1.0 / (1.0 + jnp.exp(-o3))                            # exact sigmoid

        o_ref[...] = jnp.where(is_last, sg, sm)

    return kernel


def _controller_call(x2d, packed, offsets, dims, tile_b):
    """Run the controller on a (B, Din) f32 batch; returns (B, Dout)."""
    din, h, dout = dims
    b = x2d.shape[0]
    assert x2d.shape[1] == din
    b_pad = _rup(max(b, 1), tile_b)
    if b_pad != b:
        x2d = jnp.pad(x2d, ((0, b_pad - b), (0, 0)))

    rows, cols = packed.shape
    flops = 2 * b_pad * (din * h + h * dout + dout * dout) + 4 * b_pad * din
    transcendentals = b_pad * (dout + 2)            # exp per softmax lane + sigmoid + rsqrt
    bytes_accessed = 4 * (b_pad * din + rows * cols + b_pad * dout)

    out = pl.pallas_call(
        _make_kernel(offsets, dims, tile_b),
        out_shape=jax.ShapeDtypeStruct((b_pad, dout), jnp.float32),
        grid=(b_pad // tile_b,),
        in_specs=[
            pl.BlockSpec((tile_b, din), lambda i: (i, 0)),   # query tile
            pl.BlockSpec((rows, cols), lambda i: (0, 0)),    # constant weight slab
        ],
        out_specs=pl.BlockSpec((tile_b, dout), lambda i: (i, 0)),
        compiler_params=pltpu.CompilerParams(
            dimension_semantics=("parallel",)),              # v7x: shard B over 2 TCs
        cost_estimate=pl.CostEstimate(flops=flops,
                                      transcendentals=transcendentals,
                                      bytes_accessed=bytes_accessed),
    )(x2d.astype(jnp.float32), packed)
    return out[:b]


def rerank_controller_forward(input_dis, packed, offsets, dims, *, tile_b=8):
    """Single-query forward, reproducing rerank_Controller.forward.

    Returns (n_weight, new_old_weight) with shapes (1, output_dim-1) and (1,).
    """
    din, _, dout = dims
    x = input_dis.reshape(1, -1).astype(jnp.float32)      # .view(1, -1)
    out = _controller_call(x, packed, offsets, dims, tile_b)
    n_weight = out[:, : dout - 1]
    new_old_weight = out[0, dout - 1:]                     # shape (1,) = output[:, K-1]
    return n_weight, new_old_weight


def rerank_controller_forward_batched(xs, packed, offsets, dims, *, tile_b=128):
    """Batched controller: xs is (B, input_dim) (or (B, ...) flattened per row).

    Returns softmax weights (B, output_dim-1) and sigmoid gate (B,).
    """
    din, _, dout = dims
    out = _controller_call(xs.reshape(xs.shape[0], -1), packed, offsets, dims, tile_b)
    return out[:, : dout - 1], out[:, dout - 1]


def init_params(key, input_dim, hidden_dim, output_dim):
    """kaiming_normal_(mode='fan_out', relu) weights + default torch bias init.
    Weights stored as (in_features, out_features)."""
    ks = jax.random.split(key, 6)

    def kaiming_fan_out(k, fan_in, fan_out):
        std = jnp.sqrt(2.0 / fan_out)
        return jax.random.normal(k, (fan_in, fan_out), jnp.float32) * std

    def bias(k, fan_in, fan_out):
        bound = 1.0 / jnp.sqrt(fan_in)
        return jax.random.uniform(k, (fan_out,), jnp.float32, -bound, bound)

    w1 = kaiming_fan_out(ks[0], input_dim, hidden_dim)
    b1 = bias(ks[1], input_dim, hidden_dim)
    w2 = kaiming_fan_out(ks[2], hidden_dim, output_dim)
    b2 = bias(ks[3], hidden_dim, output_dim)
    w3 = kaiming_fan_out(ks[4], output_dim, output_dim)
    b3 = bias(ks[5], output_dim, output_dim)
    return w1, b1, w2, b2, w3, b3


def reference_forward_batched(xs, w1, b1, w2, b2, w3, b3):
    """Pure-JAX (highest precision) reference of the PyTorch module, batched."""
    hi = jax.lax.Precision.HIGHEST
    x = xs.reshape(xs.shape[0], -1).astype(jnp.float32)
    x = x / jnp.maximum(jnp.sqrt(jnp.sum(x * x, axis=1, keepdims=True)), 1e-12)
    h1 = jnp.maximum(jnp.dot(x, w1, precision=hi) + b1, 0.0)
    h2 = jnp.maximum(jnp.dot(h1, w2, precision=hi) + b2, 0.0)
    o3 = jnp.dot(h2, w3, precision=hi) + b3
    k = o3.shape[1]
    n_weight = jax.nn.softmax(o3[:, : k - 1], axis=-1)
    new_old = jax.nn.sigmoid(o3[:, k - 1])
    return n_weight, new_old


if __name__ == "__main__":
    key = jax.random.PRNGKey(0)
    k_in, k_par, k_batch = jax.random.split(key, 3)

    # Small shapes: input_dis is an (8, 8) "distance" tensor -> flattened to 64.
    input_dim, hidden_dim, output_dim = 64, 32, 8

    w1, b1, w2, b2, w3, b3 = init_params(k_par, input_dim, hidden_dim, output_dim)
    packed, offsets, dims = pack_params(w1, b1, w2, b2, w3, b3)

    # ---- Single-query path (exact original module semantics) ----
    input_dis = jax.random.normal(k_in, (8, 8), jnp.float32)
    n_weight, new_old_weight = rerank_controller_forward(input_dis, packed,
                                                         offsets, dims)
    jax.block_until_ready((n_weight, new_old_weight))

    ref_nw, ref_no = reference_forward_batched(input_dis.reshape(1, -1),
                                               w1, b1, w2, b2, w3, b3)
    assert n_weight.shape == (1, output_dim - 1)
    assert new_old_weight.shape == (1,)
    assert float(jnp.max(jnp.abs(n_weight - ref_nw))) < 5e-3
    assert float(jnp.max(jnp.abs(new_old_weight - ref_no))) < 5e-3
    # Exact softmax division -> tight simplex check (was 5e-3 with approx recip).
    assert abs(float(jnp.sum(n_weight)) - 1.0) < 1e-5
    assert 0.0 < float(new_old_weight[0]) < 1.0

    # ---- Batched path (the perf-relevant configuration) ----
    B = 256
    xs = jax.random.normal(k_batch, (B, input_dim), jnp.float32)
    nw_b, no_b = rerank_controller_forward_batched(xs, packed, offsets, dims,
                                                   tile_b=128)
    jax.block_until_ready((nw_b, no_b))

    ref_nw_b, ref_no_b = reference_forward_batched(xs, w1, b1, w2, b2, w3, b3)
    assert nw_b.shape == (B, output_dim - 1) and no_b.shape == (B,)
    assert float(jnp.max(jnp.abs(nw_b - ref_nw_b))) < 5e-3
    assert float(jnp.max(jnp.abs(no_b - ref_no_b))) < 5e-3
    assert float(jnp.max(jnp.abs(jnp.sum(nw_b, axis=1) - 1.0))) < 1e-5

    print("KERNEL_OK")
</pallas_src>

<mosaic_0001>
module attributes {stable_mosaic.version = 11 : i64} {
  func.func @kernel(%arg0: i32, %arg1: memref<8x64xf32, #tpu.memory_space<vmem>>, %arg2: memref<72x128xf32, #tpu.memory_space<vmem>>, %arg3: memref<8x8xf32, #tpu.memory_space<vmem>>) attributes {dimension_semantics = [#tpu.dimension_semantics<parallel>], iteration_bounds = array<i64: 1>, scalar_prefetch = 0 : i64, scratch_operands = 0 : i64, tpu.core_type = #tpu.core_type<tc>, window_params = [{transform_indices = @transform_0, window_bounds = array<i64: 8, 64>}, {pipeline_mode = #tpu.pipeline_mode<synchronous>, transform_indices = @transform_1, window_bounds = array<i64: 72, 128>}, {transform_indices = @transform_2, window_bounds = array<i64: 8, 8>}]} {
    %c0 = arith.constant 0 : index
    %c0_0 = arith.constant 0 : index
    %0 = vector.load %arg1[%c0, %c0_0] : memref<8x64xf32, #tpu.memory_space<vmem>>, vector<8x64xf32>
    %1 = arith.mulf %0, %0 : vector<8x64xf32>
    %cst = arith.constant dense<0.000000e+00> : vector<8xf32>
    %2 = vector.multi_reduction <add>, %1, %cst [1] : vector<8x64xf32> to vector<8xf32>
    %3 = vector.shape_cast %2 : vector<8xf32> to vector<8x1xf32>
    %cst_1 = arith.constant 1.000000e-24 : f32
    %4 = vector.broadcast %cst_1 : f32 to vector<8x1xf32>
    %5 = arith.maximumf %3, %4 : vector<8x1xf32>
    %6 = math.rsqrt %5 : vector<8x1xf32>
    %7 = vector.broadcast %6 : vector<8x1xf32> to vector<8x64xf32>
    %8 = arith.mulf %0, %7 : vector<8x64xf32>
    %c0_2 = arith.constant 0 : index
    %c0_3 = arith.constant 0 : index
    %9 = vector.load %arg2[%c0_2, %c0_3] : memref<72x128xf32, #tpu.memory_space<vmem>>, vector<64x32xf32>
    %c64 = arith.constant 64 : index
    %c0_4 = arith.constant 0 : index
    %10 = vector.load %arg2[%c64, %c0_4] : memref<72x128xf32, #tpu.memory_space<vmem>>, vector<1x32xf32>
    %cst_5 = arith.constant dense<0.000000e+00> : vector<8x32xf32>
    %11 = tpu.matmul %8, %9, %cst_5 {dimension_numbers = #tpu.dot_dimension_numbers<[1], [0], [0], [1], [0, 0, 1, 1], [], []>} : vector<8x64xf32>, vector<64x32xf32>, vector<8x32xf32> -> vector<8x32xf32>
    %12 = vector.broadcast %10 : vector<1x32xf32> to vector<8x32xf32>
    %13 = arith.addf %11, %12 : vector<8x32xf32>
    %cst_6 = arith.constant 0.000000e+00 : f32
    %14 = vector.broadcast %cst_6 : f32 to vector<8x32xf32>
    %15 = arith.maximumf %13, %14 : vector<8x32xf32>
    %c0_7 = arith.constant 0 : index
    %c32 = arith.constant 32 : index
    %16 = vector.load %arg2[%c0_7, %c32] : memref<72x128xf32, #tpu.memory_space<vmem>>, vector<32x8xf32>
    %c65 = arith.constant 65 : index
    %c0_8 = arith.constant 0 : index
    %17 = vector.load %arg2[%c65, %c0_8] : memref<72x128xf32, #tpu.memory_space<vmem>>, vector<1x8xf32>
    %cst_9 = arith.constant dense<0.000000e+00> : vector<8x8xf32>
    %18 = tpu.matmul %15, %16, %cst_9 {dimension_numbers = #tpu.dot_dimension_numbers<[1], [0], [0], [1], [0, 0, 1, 1], [], []>} : vector<8x32xf32>, vector<32x8xf32>, vector<8x8xf32> -> vector<8x8xf32>
    %19 = vector.broadcast %17 : vector<1x8xf32> to vector<8x8xf32>
    %20 = arith.addf %18, %19 : vector<8x8xf32>
    %cst_10 = arith.constant 0.000000e+00 : f32
    %21 = vector.broadcast %cst_10 : f32 to vector<8x8xf32>
    %22 = arith.maximumf %20, %21 : vector<8x8xf32>
    %c0_11 = arith.constant 0 : index
    %c40 = arith.constant 40 : index
    %23 = vector.load %arg2[%c0_11, %c40] : memref<72x128xf32, #tpu.memory_space<vmem>>, vector<8x8xf32>
    %c66 = arith.constant 66 : index
    %c0_12 = arith.constant 0 : index
    %24 = vector.load %arg2[%c66, %c0_12] : memref<72x128xf32, #tpu.memory_space<vmem>>, vector<1x8xf32>
    %cst_13 = arith.constant dense<0.000000e+00> : vector<8x8xf32>
    %25 = tpu.matmul %22, %23, %cst_13 {dimension_numbers = #tpu.dot_dimension_numbers<[1], [0], [0], [1], [0, 0, 1, 1], [], []>} : vector<8x8xf32>, vector<8x8xf32>, vector<8x8xf32> -> vector<8x8xf32>
    %26 = vector.broadcast %24 : vector<1x8xf32> to vector<8x8xf32>
    %27 = arith.addf %25, %26 : vector<8x8xf32>
    %28 = tpu.iota {dimensions = array<i32: 1>} : vector<8x8xi32>
    %c7_i32 = arith.constant 7 : i32
    %29 = vector.broadcast %c7_i32 : i32 to vector<8x8xi32>
    %30 = arith.cmpi eq, %28, %29 : vector<8x8xi32>
    %cst_14 = arith.constant 0xFF800000 : f32
    %31 = vector.broadcast %cst_14 : f32 to vector<8x8xf32>
    %32 = arith.select %30, %31, %27 : vector<8x8xi1>, vector<8x8xf32>
    %cst_15 = arith.constant dense<0xFF800000> : vector<8xf32>
    %33 = vector.multi_reduction <maximumf>, %32, %cst_15 [1] : vector<8x8xf32> to vector<8xf32>
    %34 = vector.shape_cast %33 : vector<8xf32> to vector<8x1xf32>
    %35 = vector.broadcast %34 : vector<8x1xf32> to vector<8x8xf32>
    %36 = arith.subf %32, %35 : vector<8x8xf32>
    %37 = math.exp %36 : vector<8x8xf32>
    %cst_16 = arith.constant dense<0.000000e+00> : vector<8xf32>
    %38 = vector.multi_reduction <add>, %37, %cst_16 [1] : vector<8x8xf32> to vector<8xf32>
    %39 = vector.shape_cast %38 : vector<8xf32> to vector<8x1xf32>
    %40 = vector.broadcast %39 : vector<8x1xf32> to vector<8x8xf32>
    %41 = arith.divf %37, %40 : vector<8x8xf32>
    %cst_17 = arith.constant 0.000000e+00 : f32
    %42 = vector.broadcast %cst_17 : f32 to vector<8x8xf32>
    %43 = arith.subf %42, %27 : vector<8x8xf32>
    %44 = math.exp %43 : vector<8x8xf32>
    %cst_18 = arith.constant 1.000000e+00 : f32
    %45 = vector.broadcast %cst_18 : f32 to vector<8x8xf32>
    %46 = arith.addf %45, %44 : vector<8x8xf32>
    %cst_19 = arith.constant 1.000000e+00 : f32
    %47 = vector.broadcast %cst_19 : f32 to vector<8x8xf32>
    %48 = arith.divf %47, %46 : vector<8x8xf32>
    %49 = arith.select %30, %48, %41 : vector<8x8xi1>, vector<8x8xf32>
    %c0_20 = arith.constant 0 : index
    %c0_21 = arith.constant 0 : index
    %50 = vector.load %arg3[%c0_20, %c0_21] : memref<8x8xf32, #tpu.memory_space<vmem>>, vector<8x8xf32>
    tpu.vector_store %arg3[%c0_20, %c0_21], %49 {strides = array<i32>} : memref<8x8xf32, #tpu.memory_space<vmem>>, vector<8x8xf32>,
    return
  }
  func.func @transform_0(%arg0: i32) -> (i32, i32) {
    %c0_i32 = arith.constant 0 : i32
    %c0_i32_0 = arith.constant 0 : i32
    return %arg0, %c0_i32 : i32, i32
  }
  func.func @transform_1(%arg0: i32) -> (i32, i32) {
    %c0_i32 = arith.constant 0 : i32
    %c0_i32_0 = arith.constant 0 : i32
    %c0_i32_1 = arith.constant 0 : i32
    return %c0_i32, %c0_i32_0 : i32, i32
  }
  func.func @transform_2(%arg0: i32) -> (i32, i32) {
    %c0_i32 = arith.constant 0 : i32
    %c0_i32_0 = arith.constant 0 : i32
    return %arg0, %c0_i32 : i32, i32
  }
}

</mosaic_0001>

<llo_original>
// kernel: tpu_custom_call.1
$region0: #{tpu_custom_call.1}
  #allocation0 [shape = 'u32[]', space=smem, size = 0x4, offset = 0x4, fixed_abs, tag = 'smem constant byte address 0x4 - core index']
  #allocation1 [shape = 'u32[144,128]{1,0:T(1,128)}', space=vmem, size = 0x12000, scoped, tag = 'internal scratch']
  %s0 = inlined_call_operand.hbm [shape: f32[8,64], index: 0, kind: input, shape index: {}]
  %s1 = inlined_call_operand.hbm [shape: f32[72,128], index: 1, kind: input, shape index: {}]
  %s2 = inlined_call_operand.hbm [shape: f32[8,8], index: 2, kind: output, shape index: {}]
  %s3 = sld [smem:[#allocation0]]
  $region26: #{tpu_custom_call.1} parent=0
    _
  %s5 = ssub.s32 1, %s3
  %s6 = scalar_select 0, %s5, %s3
  $region1: #{tpu_custom_call.1} parent=0
    #allocation2 [shape = 'u8[4096]{0}', space=vmem, size = 0x1000, scoped, tag = 'input window, operand 0, single buffered']
    #allocation3 [shape = 's32[1]{0}', space=sflag, size = 0x4, scoped, tag = 'scoped memory for tpu_custom_call.1']
    #allocation4 [shape = 's32[1]{0}', space=sflag, size = 0x4, scoped, tag = 'scoped memory for tpu_custom_call.1']
    #allocation5 [shape = 'u8[36864]{0}', space=vmem, size = 0x9000, scoped, tag = 'input window, operand 1, single buffered']
    #allocation6 [shape = 's32[1]{0}', space=sflag, size = 0x4, scoped, tag = 'scoped memory for tpu_custom_call.1']
    #allocation7 [shape = 'u8[4096]{0}', space=vmem, size = 0x1000, scoped, tag = 'output window, operand 0, single buffered']
    %7 = vsyncpa [#allocation3], 0
    %8 = vsyncpa [#allocation6], 0
    %9 = vsyncpa [#allocation4], 0
    // Predicated region
    $region2: #{tpu_custom_call.1} parent=1 // pred_check
      _
    $region3: #{tpu_custom_call.1} parent=1 // pred_check_branch
      %11 = sbr.rel (0) target = $region5
    $region4: #{tpu_custom_call.1} parent=1 // pred_region
      %s13 = ssub.s32 128, 128
      %14 = vsyncadd [#allocation3], %s13
      %s16 = sshll.u32 [#allocation2], 4
      %s17 = int_to_ptr.vmem [resolvable:$true] %s16
      %19 = dma.hbm_to_vmem [thread:$0]  %s0, 128, %s17, [#allocation3]
    $region5: #{tpu_custom_call.1} parent=1 // pred_fallthru
      _
    // Predicated region
    $region6: #{tpu_custom_call.1} parent=1 // pred_check
      _
    $region7: #{tpu_custom_call.1} parent=1 // pred_check_branch
      %21 = sbr.rel (0) target = $region9
    $region8: #{tpu_custom_call.1} parent=1 // pred_region
      %s23 = ssub.s32 1152, 1152
      %24 = vsyncadd [#allocation6], %s23
      %s25 = sshll.u32 [#allocation5], 4
      %s26 = int_to_ptr.vmem [resolvable:$true] %s25
      %31 = dma.hbm_to_vmem [thread:$0]  %s1, 1152, %s26, [#allocation6], 128, 128, 8
    $region9: #{tpu_custom_call.1} parent=1 // pred_fallthru
      _
    // Predicated region
    $region10: #{tpu_custom_call.1} parent=1 // pred_check
      _
    $region11: #{tpu_custom_call.1} parent=1 // pred_check_branch
      %33 = sbr.rel (0) target = $region13
    $region12: #{tpu_custom_call.1} parent=1 // pred_region
      %34 = dma.done [#allocation3], 128
    $region13: #{tpu_custom_call.1} parent=1 // pred_fallthru
      _
    // Predicated region
    $region14: #{tpu_custom_call.1} parent=1 // pred_check
      _
    $region15: #{tpu_custom_call.1} parent=1 // pred_check_branch
      %36 = sbr.rel (0) target = $region17
    $region16: #{tpu_custom_call.1} parent=1 // pred_region
      %37 = dma.done [#allocation6], 1152
    $region17: #{tpu_custom_call.1} parent=1 // pred_fallthru
      _
    %v38 = vld [vmem:[#allocation2] sm:$0xff]
    %v39 = vmul.f32 %v38, %v38
    %vm40 = vcmask 523264
    %v41 = vsel %vm40, %v39, 0.0
    %42 = vadd.xlane.f32.xlu0 %v41
    %v43 = vpop.xlane.xlu0 %42
    %v44 = vmax.f32 %v43, 1e-24
    %v45 = vrsqrt.pop %v44
    %v46 = vmul.f32 %v38, %v45
    %v47 = vld [vmem:[#allocation5] sm:$0xff]
    %v48 = vld [vmem:[#allocation5 + $0x8] sm:$0xff]
    %v49 = vld [vmem:[#allocation5 + $0x10] sm:$0xff]
    %v50 = vld [vmem:[#allocation5 + $0x18] sm:$0xff]
    %v51 = vld [vmem:[#allocation5 + $0x20] sm:$0xff]
    %v52 = vld [vmem:[#allocation5 + $0x28] sm:$0xff]
    %v53 = vld [vmem:[#allocation5 + $0x30] sm:$0xff]
    %v54 = vld [vmem:[#allocation5 + $0x38] sm:$0xff]
    %v55 = vld [vmem:[#allocation5 + $0x40] sm:$0x1]
    %v56 = vlaneseq
    %v57 = vshrl.u32 %v56, 7
    %v58 = vsub.s32 0, %v57
    %v59 = vrot.slane %v55, %v58
    %v61 = vsel %vm40, %v46, 0
    %63 = vmatprep.subr.mxu0 0.0
    %64 = vmatpush1.msra.mxu0 0.0
    %65 = vmatprep.subr.mxu0 0.0
    %66 = vmatpush1.msra.mxu0 0.0
    %67 = vmatprep.subr.mxu0 0.0
    %68 = vmatpush1.msra.mxu0 0.0
    %69 = vmatprep.subr.mxu0 0.0
    %70 = vmatpush1.msra.mxu0 0.0
    %71 = vmatprep.subr.mxu0 0.0
    %72 = vmatpush1.msra.mxu0 0.0
    %73 = vmatprep.subr.mxu0 0.0
    %74 = vmatpush1.msra.mxu0 0.0
    %75 = vmatprep.subr.mxu0 0.0
    %76 = vmatpush1.msra.mxu0 0.0
    %77 = vmatprep.subr.mxu0 0.0
    %78 = vmatpush1.msra.mxu0 0.0
    %79 = vmatprep.subr.mxu0 0.0
    %80 = vmatpush1.msra.mxu0 %v54
    %81 = vmatprep.subr.mxu0 0.0
    %82 = vmatpush1.msra.mxu0 %v53
    %83 = vmatprep.subr.mxu0 0.0
    %84 = vmatpush1.msra.mxu0 %v52
    %85 = vmatprep.subr.mxu0 0.0
    %86 = vmatpush1.msra.mxu0 %v51
    %87 = vmatprep.subr.mxu0 0.0
    %88 = vmatpush1.msra.mxu0 %v50
    %89 = vmatprep.subr.mxu0 0.0
    %90 = vmatpush1.msra.mxu0 %v49
    %91 = vmatprep.subr.mxu0 0.0
    %92 = vmatpush1.msra.mxu0 %v48
    %93 = vmatprep.subr.mxu0 0.0
    %94 = vmatpush1.msra.mxu0 %v47
    %95 = vmatprep.subr.mxu0 0.0
    %96 = vmatpush2.msra.mxu0 0.0
    %97 = vmatprep.subr.mxu0 0.0
    %98 = vmatpush2.msra.mxu0 0.0
    %99 = vmatprep.subr.mxu0 0.0
    %100 = vmatpush2.msra.mxu0 0.0
    %101 = vmatprep.subr.mxu0 0.0
    %102 = vmatpush2.msra.mxu0 0.0
    %103 = vmatprep.subr.mxu0 0.0
    %104 = vmatpush2.msra.mxu0 0.0
    %105 = vmatprep.subr.mxu0 0.0
    %106 = vmatpush2.msra.mxu0 0.0
    %107 = vmatprep.subr.mxu0 0.0
    %108 = vmatpush2.msra.mxu0 0.0
    %109 = vmatprep.subr.mxu0 0.0
    %110 = vmatpush2.msra.mxu0 0.0
    %111 = vmatprep.subr.mxu0 0.0
    %112 = vmatpush2.msra.mxu0 0.0
    %113 = vmatprep.subr.mxu0 0.0
    %114 = vmatpush2.msra.mxu0 0.0
    %115 = vmatprep.subr.mxu0 0.0
    %116 = vmatpush2.msra.mxu0 0.0
    %117 = vmatprep.subr.mxu0 0.0
    %118 = vmatpush2.msra.mxu0 0.0
    %119 = vmatprep.subr.mxu0 0.0
    %120 = vmatpush2.msra.mxu0 0.0
    %121 = vmatprep.subr.mxu0 0.0
    %122 = vmatpush2.msra.mxu0 0.0
    %123 = vmatprep.subr.mxu0 0.0
    %124 = vmatpush2.msra.mxu0 0.0
    %125 = vmatprep.subr.mxu0 0.0
    %126 = vmatpush2.msra.mxu0 0.0
    %127 = vmatprep.mubr.f32.mxu0 0.0
    %128 = vmatmul.mubr.f32.gmra.mxu0 %v61
    %v129 = vpop.f32.mrf.mxu0
    %v130 = vadd.f32 %v59, %v129
    %v131 = vpop.f32.mrf.mxu0
    %132 = vdwg.mxu0
    %v133 = vmax.f32 %v130, 0.0
    %v134 = vld [vmem:[#allocation5] sm:$0xff]
    %v135 = vld [vmem:[#allocation5 + $0x8] sm:$0xff]
    %v136 = vld [vmem:[#allocation5 + $0x10] sm:$0xff]
    %v137 = vld [vmem:[#allocation5 + $0x18] sm:$0xff]
    %v138 = vld [vmem:[#allocation5 + $0x41] sm:$0x1]
    %v139 = vlaneseq
    %v140 = vshrl.u32 %v139, 7
    %v141 = vsub.s32 0, %v140
    %v142 = vrot.slane %v138, %v141
    %147 = vrot.lane.b32.xlu0 %v134, 96
    %v148 = vpop.permute.xlu0 %147
    %149 = vrot.lane.b32.xlu0 %v135, 96
    %v150 = vpop.permute.xlu0 %149
    %151 = vrot.lane.b32.xlu0 %v136, 96
    %v152 = vpop.permute.xlu0 %151
    %153 = vrot.lane.b32.xlu0 %v137, 96
    %v154 = vpop.permute.xlu0 %153
    %vm159 = vcmask 261120
    %v161 = vsel %vm159, %v133, 0
    %163 = vmatprep.subr.mxu0 0.0
    %164 = vmatpush1.msra.mxu0 0.0
    %165 = vmatprep.subr.mxu0 0.0
    %166 = vmatpush1.msra.mxu0 0.0
    %167 = vmatprep.subr.mxu0 0.0
    %168 = vmatpush1.msra.mxu0 0.0
    %169 = vmatprep.subr.mxu0 0.0
    %170 = vmatpush1.msra.mxu0 0.0
    %171 = vmatprep.subr.mxu0 0.0
    %172 = vmatpush1.msra.mxu0 0.0
    %173 = vmatprep.subr.mxu0 0.0
    %174 = vmatpush1.msra.mxu0 0.0
    %175 = vmatprep.subr.mxu0 0.0
    %176 = vmatpush1.msra.mxu0 0.0
    %177 = vmatprep.subr.mxu0 0.0
    %178 = vmatpush1.msra.mxu0 0.0
    %179 = vmatprep.subr.mxu0 0.0
    %180 = vmatpush1.msra.mxu0 0.0
    %181 = vmatprep.subr.mxu0 0.0
    %182 = vmatpush1.msra.mxu0 0.0
    %183 = vmatprep.subr.mxu0 0.0
    %184 = vmatpush1.msra.mxu0 0.0
    %185 = vmatprep.subr.mxu0 0.0
    %186 = vmatpush1.msra.mxu0 0.0
    %187 = vmatprep.subr.mxu0 0.0
    %188 = vmatpush1.msra.mxu0 %v154
    %189 = vmatprep.subr.mxu0 0.0
    %190 = vmatpush1.msra.mxu0 %v152
    %191 = vmatprep.subr.mxu0 0.0
    %192 = vmatpush1.msra.mxu0 %v150
    %193 = vmatprep.subr.mxu0 0.0
    %194 = vmatpush1.msra.mxu0 %v148
    %195 = vmatprep.subr.mxu0 0.0
    %196 = vmatpush2.msra.mxu0 0.0
    %197 = vmatprep.subr.mxu0 0.0
    %198 = vmatpush2.msra.mxu0 0.0
    %199 = vmatprep.subr.mxu0 0.0
    %200 = vmatpush2.msra.mxu0 0.0
    %201 = vmatprep.subr.mxu0 0.0
    %202 = vmatpush2.msra.mxu0 0.0
    %203 = vmatprep.subr.mxu0 0.0
    %204 = vmatpush2.msra.mxu0 0.0
    %205 = vmatprep.subr.mxu0 0.0
    %206 = vmatpush2.msra.mxu0 0.0
    %207 = vmatprep.subr.mxu0 0.0
    %208 = vmatpush2.msra.mxu0 0.0
    %209 = vmatprep.subr.mxu0 0.0
    %210 = vmatpush2.msra.mxu0 0.0
    %211 = vmatprep.subr.mxu0 0.0
    %212 = vmatpush2.msra.mxu0 0.0
    %213 = vmatprep.subr.mxu0 0.0
    %214 = vmatpush2.msra.mxu0 0.0
    %215 = vmatprep.subr.mxu0 0.0
    %216 = vmatpush2.msra.mxu0 0.0
    %217 = vmatprep.subr.mxu0 0.0
    %218 = vmatpush2.msra.mxu0 0.0
    %219 = vmatprep.subr.mxu0 0.0
    %220 = vmatpush2.msra.mxu0 0.0
    %221 = vmatprep.subr.mxu0 0.0
    %222 = vmatpush2.msra.mxu0 0.0
    %223 = vmatprep.subr.mxu0 0.0
    %224 = vmatpush2.msra.mxu0 0.0
    %225 = vmatprep.subr.mxu0 0.0
    %226 = vmatpush2.msra.mxu0 0.0
    %227 = vmatprep.mubr.f32.mxu0 0.0
    %228 = vmatmul.mubr.f32.gmra.mxu0 %v161
    %v229 = vpop.f32.mrf.mxu0
    %v230 = vadd.f32 %v142, %v229
    %v231 = vpop.f32.mrf.mxu0
    %232 = vdwg.mxu0
    %v233 = vmax.f32 %v230, 0.0
    %v234 = vld [vmem:[#allocation5] sm:$0xff]
    %v235 = vld [vmem:[#allocation5 + $0x42] sm:$0x1]
    %v236 = vlaneseq
    %v237 = vshrl.u32 %v236, 7
    %v238 = vsub.s32 0, %v237
    %v239 = vrot.slane %v235, %v238
    %241 = vrot.lane.b32.xlu0 %v234, 88
    %v242 = vpop.permute.xlu0 %241
    %vm244 = vcmask 64512
    %v246 = vsel %vm244, %v233, 0
    %248 = vmatprep.subr.mxu0 0.0
    %249 = vmatpush1.msra.mxu0 0.0
    %250 = vmatprep.subr.mxu0 0.0
    %251 = vmatpush1.msra.mxu0 0.0
    %252 = vmatprep.subr.mxu0 0.0
    %253 = vmatpush1.msra.mxu0 0.0
    %254 = vmatprep.subr.mxu0 0.0
    %255 = vmatpush1.msra.mxu0 0.0
    %256 = vmatprep.subr.mxu0 0.0
    %257 = vmatpush1.msra.mxu0 0.0
    %258 = vmatprep.subr.mxu0 0.0
    %259 = vmatpush1.msra.mxu0 0.0
    %260 = vmatprep.subr.mxu0 0.0
    %261 = vmatpush1.msra.mxu0 0.0
    %262 = vmatprep.subr.mxu0 0.0
    %263 = vmatpush1.msra.mxu0 0.0
    %264 = vmatprep.subr.mxu0 0.0
    %265 = vmatpush1.msra.mxu0 0.0
    %266 = vmatprep.subr.mxu0 0.0
    %267 = vmatpush1.msra.mxu0 0.0
    %268 = vmatprep.subr.mxu0 0.0
    %269 = vmatpush1.msra.mxu0 0.0
    %270 = vmatprep.subr.mxu0 0.0
    %271 = vmatpush1.msra.mxu0 0.0
    %272 = vmatprep.subr.mxu0 0.0
    %273 = vmatpush1.msra.mxu0 0.0
    %274 = vmatprep.subr.mxu0 0.0
    %275 = vmatpush1.msra.mxu0 0.0
    %276 = vmatprep.subr.mxu0 0.0
    %277 = vmatpush1.msra.mxu0 0.0
    %278 = vmatprep.subr.mxu0 0.0
    %279 = vmatpush1.msra.mxu0 %v242
    %280 = vmatprep.subr.mxu0 0.0
    %281 = vmatpush2.msra.mxu0 0.0
    %282 = vmatprep.subr.mxu0 0.0
    %283 = vmatpush2.msra.mxu0 0.0
    %284 = vmatprep.subr.mxu0 0.0
    %285 = vmatpush2.msra.mxu0 0.0
    %286 = vmatprep.subr.mxu0 0.0
    %287 = vmatpush2.msra.mxu0 0.0
    %288 = vmatprep.subr.mxu0 0.0
    %289 = vmatpush2.msra.mxu0 0.0
    %290 = vmatprep.subr.mxu0 0.0
    %291 = vmatpush2.msra.mxu0 0.0
    %292 = vmatprep.subr.mxu0 0.0
    %293 = vmatpush2.msra.mxu0 0.0
    %294 = vmatprep.subr.mxu0 0.0
    %295 = vmatpush2.msra.mxu0 0.0
    %296 = vmatprep.subr.mxu0 0.0
    %297 = vmatpush2.msra.mxu0 0.0
    %298 = vmatprep.subr.mxu0 0.0
    %299 = vmatpush2.msra.mxu0 0.0
    %300 = vmatprep.subr.mxu0 0.0
    %301 = vmatpush2.msra.mxu0 0.0
    %302 = vmatprep.subr.mxu0 0.0
    %303 = vmatpush2.msra.mxu0 0.0
    %304 = vmatprep.subr.mxu0 0.0
    %305 = vmatpush2.msra.mxu0 0.0
    %306 = vmatprep.subr.mxu0 0.0
    %307 = vmatpush2.msra.mxu0 0.0
    %308 = vmatprep.subr.mxu0 0.0
    %309 = vmatpush2.msra.mxu0 0.0
    %310 = vmatprep.subr.mxu0 0.0
    %311 = vmatpush2.msra.mxu0 0.0
    %312 = vmatprep.mubr.f32.mxu0 0.0
    %313 = vmatmul.mubr.f32.gmra.mxu0 %v246
    %v314 = vpop.f32.mrf.mxu0
    %v315 = vadd.f32 %v239, %v314
    %v316 = vpop.f32.mrf.mxu0
    %317 = vdwg.mxu0
    %v318 = vlaneseq
    %v319 = vand.u32 %v318, 127
    %vm320 = vcmp.eq.s32.totalorder %v319, 7
    %v321 = vsel %vm320, -inf, %v315
    %v322 = vsel %vm244, %v321, -inf
    %323 = vmax.xlane.f32.xlu0 %v322
    %v324 = vpop.xlane.xlu0 %323
    %v325 = vsub.f32 %v321, %v324
    %v326 = vmul.f32 %v325, 1.442695
    %v327 = vpow.pop %v326
    %v328 = vsel %vm244, %v327, 0.0
    %329 = vadd.xlane.f32.xlu0 %v328
    %v330 = vpop.xlane.xlu0 %329
    %v331 = vrcp.pop %v330
    %v332 = vmul.f32 %v327, %v331
    %v333 = vsub.f32 0.0, %v315
    %v334 = vmul.f32 %v333, 1.442695
    %v335 = vpow.pop %v334
    %v336 = vadd.f32 %v335, 1.0
    %v337 = vrcp.pop %v336
    %v338 = vmul.f32 1.0, %v337
    %v339 = vsel %vm320, %v338, %v332
    %340 = vst.msk [vmem:[#allocation7] sm:$0xff] %vm244, %v339
    // Predicated region
    $region18: #{tpu_custom_call.1} parent=1 // pred_check
      _
    $region19: #{tpu_custom_call.1} parent=1 // pred_check_branch
      %342 = sbr.rel (0) target = $region21
    $region20: #{tpu_custom_call.1} parent=1 // pred_region
      %s344 = ssub.s32 128, 128
      %345 = vsyncadd [#allocation4], %s344
      %s347 = sshll.u32 [#allocation7], 4
      %s348 = int_to_ptr.vmem [resolvable:$true] %s347
      %350 = dma.vmem_to_hbm [thread:$0]  %s348, 128, %s2, [#allocation4]
    $region21: #{tpu_custom_call.1} parent=1 // pred_fallthru
      _
    // Predicated region
    $region22: #{tpu_custom_call.1} parent=1 // pred_check
      _
    $region23: #{tpu_custom_call.1} parent=1 // pred_check_branch
      %352 = sbr.rel (0) target = $region25
    $region24: #{tpu_custom_call.1} parent=1 // pred_region
      %353 = dma.done [#allocation4], 128
    $region25: #{tpu_custom_call.1} parent=1 // pred_fallthru
      _
    %354 = vsyncpa [#allocation3], 1
    %355 = vsyncpa [#allocation6], 1
    %356 = vsyncpa [#allocation4], 1

</llo_original>
